<compile_context>
chip_gen: v7x
topology: tpu7x:2x2x1
jax: 0.10.0
libtpu: 0.0.40
codegen_flags: <defaults>
</compile_context>

<pallas_src>
import functools

import jax
import jax.numpy as jnp
from jax.experimental import pallas as pl
from jax.experimental.pallas import tpu as pltpu


def _bce_bound_sums_kernel(pred_ref, targ_ref, out_ref, acc_ref, *,
                           tr, s_valid, needs_mask):
    # pred_ref / targ_ref: (1, C, TR, 128) block of the (B, C, R, 128) view.
    # out_ref: (1, 3, C) per-batch sums [sum t*log(p), sum (1-t)*log(1-p), sum t].
    # acc_ref: VMEM scratch (3, C, 128), resident across the spatial grid axis.
    j = pl.program_id(1)
    last = pl.num_programs(1) - 1

    @pl.when(j == 0)
    def _():
        acc_ref[...] = jnp.zeros_like(acc_ref)

    def accumulate(mask_tail):
        p = pred_ref[0].astype(jnp.float32)   # (C, TR, 128)
        t = targ_ref[0].astype(jnp.float32)
        pc = jnp.clip(p, 0.001, 1.0 - 0.001)
        pos = t * jnp.log(pc)
        neg = (1.0 - t) * jnp.log(1.0 - pc)
        tsum = t
        if mask_tail:
            # Mask garbage from the ragged last block / lane padding.
            row = jax.lax.broadcasted_iota(jnp.int32, p.shape, 1) + j * tr
            lane = jax.lax.broadcasted_iota(jnp.int32, p.shape, 2)
            valid = row * 128 + lane < s_valid
            pos = jnp.where(valid, pos, 0.0)
            neg = jnp.where(valid, neg, 0.0)
            tsum = jnp.where(valid, tsum, 0.0)
        # Reduce the tile over the TR axis first, then do small (C, 128) RMWs.
        acc_ref[0] += jnp.sum(pos, axis=1)
        acc_ref[1] += jnp.sum(neg, axis=1)
        acc_ref[2] += jnp.sum(tsum, axis=1)

    if needs_mask:
        @pl.when(j != last)
        def _():
            accumulate(False)

        @pl.when(j == last)
        def _():
            accumulate(True)
    else:
        accumulate(False)

    @pl.when(j == last)
    def _():
        out_ref[...] = jnp.sum(acc_ref[...], axis=-1)[None, :, :]  # (1, 3, C)


def _pick_row_tile(r, c, itemsize):
    """Pick TR so 2 inputs x 2 pipeline buffers stay within ~16 MiB of VMEM."""
    budget_bytes = 16 * 1024 * 1024
    per_row_bytes = 4 * c * 128 * max(itemsize, 1)
    tr_cap = max(8, (budget_bytes // per_row_bytes) // 8 * 8)
    return r if r <= tr_cap else tr_cap


def bce_loss_boud(predict, target):
    """Pallas implementation of BCELossBoud.forward (predict is a probability map)."""
    assert predict.shape == target.shape
    bs, c, d, w, h = target.shape
    s = d * w * h
    n = bs * s

    # Free, contiguous view: NCDHW -> (B, C, S). Inputs stay in native dtype.
    p3 = predict.reshape(bs, c, s)
    t3 = target.reshape(bs, c, s)

    # Pad the spatial axis only up to the next lane multiple (usually a no-op).
    s128 = ((s + 127) // 128) * 128
    if s128 != s:
        p3 = jnp.pad(p3, ((0, 0), (0, 0), (0, s128 - s)))
        t3 = jnp.pad(t3, ((0, 0), (0, 0), (0, s128 - s)))
    r = s128 // 128
    p4 = p3.reshape(bs, c, r, 128)
    t4 = t3.reshape(bs, c, r, 128)

    itemsize = max(jnp.dtype(predict.dtype).itemsize,
                   jnp.dtype(target.dtype).itemsize)
    tr = _pick_row_tile(r, c, itemsize)
    nj = pl.cdiv(r, tr)
    needs_mask = (s128 != s) or (r % tr != 0)

    kernel = functools.partial(_bce_bound_sums_kernel,
                               tr=tr, s_valid=s, needs_mask=needs_mask)
    partial_sums = pl.pallas_call(
        kernel,
        out_shape=jax.ShapeDtypeStruct((bs, 3, c), jnp.float32),
        grid_spec=pltpu.PrefetchScalarGridSpec(
            num_scalar_prefetch=0,
            grid=(bs, nj),
            in_specs=[
                pl.BlockSpec((1, c, tr, 128), lambda b, j: (b, 0, j, 0)),
                pl.BlockSpec((1, c, tr, 128), lambda b, j: (b, 0, j, 0)),
            ],
            out_specs=pl.BlockSpec((1, 3, c), lambda b, j: (b, 0, 0)),
            scratch_shapes=[pltpu.VMEM((3, c, 128), jnp.float32)],
        ),
        compiler_params=pltpu.CompilerParams(
            dimension_semantics=("parallel", "arbitrary"),
            vmem_limit_bytes=32 * 1024 * 1024,
        ),
    )(p4, t4)

    sums = jnp.sum(partial_sums, axis=0)  # (3, C): combine per-batch partials
    pos_sum, neg_sum, targ_sum = sums[0], sums[1], sums[2]
    # tt = log(D*W*H / (sum(target[:, i]) + 1)), per channel.
    tt = jnp.log(jnp.float32(d * w * h) / (targ_sum + 1.0))
    # per-channel: -mean( tt * t*log(p) + (1-t)*log(1-p) ), then mean over channels.
    per_channel = -(tt * pos_sum + neg_sum) / jnp.float32(n)
    return jnp.mean(per_channel)


def bce_loss_boud_reference(predict, target):
    """Pure-JAX reference mirroring the PyTorch module exactly."""
    bs, c, d, w, h = target.shape
    losses = []
    for i in range(predict.shape[1]):
        p = jnp.clip(predict[:, i], 0.001, 1.0 - 0.001)
        t = target[:, i]
        tt = jnp.log(d * w * h / (jnp.sum(t) + 1.0))
        bce = tt * (t * jnp.log(p)) + (1.0 - t) * jnp.log(1.0 - p)
        losses.append(-jnp.mean(bce))
    return jnp.mean(jnp.stack(losses))


if __name__ == "__main__":
    key = jax.random.PRNGKey(0)
    kp, kt = jax.random.split(key)

    # Main test: (batch=2, channels=4, depth=8, width=8, height=8), S % 128 == 0.
    shape = (2, 4, 8, 8, 8)
    predict = jax.random.uniform(kp, shape, dtype=jnp.float32, minval=0.0, maxval=1.0)
    target = (jax.random.uniform(kt, shape, dtype=jnp.float32) > 0.7).astype(jnp.float32)

    loss = jax.block_until_ready(bce_loss_boud(predict, target))
    ref = jax.block_until_ready(bce_loss_boud_reference(predict, target))
    assert jnp.isfinite(loss), "kernel produced non-finite loss"
    assert jnp.allclose(loss, ref, rtol=1e-5, atol=1e-5), (loss, ref)

    # Ragged test: S = 5*6*7 = 210 (not a multiple of 128) exercises the masked path.
    kp2, kt2 = jax.random.split(jax.random.PRNGKey(1))
    shape2 = (2, 3, 5, 6, 7)
    predict2 = jax.random.uniform(kp2, shape2, dtype=jnp.float32, minval=0.0, maxval=1.0)
    target2 = (jax.random.uniform(kt2, shape2, dtype=jnp.float32) > 0.7).astype(jnp.float32)

    loss2 = jax.block_until_ready(bce_loss_boud(predict2, target2))
    ref2 = jax.block_until_ready(bce_loss_boud_reference(predict2, target2))
    assert jnp.isfinite(loss2), "kernel produced non-finite loss (ragged)"
    assert jnp.allclose(loss2, ref2, rtol=1e-5, atol=1e-5), (loss2, ref2)

    print("KERNEL_OK")
</pallas_src>

<mosaic_0001>
module attributes {stable_mosaic.version = 11 : i64} {
  func.func @_bce_bound_sums_kernel(%arg0: i32, %arg1: i32, %arg2: memref<1x4x4x128xf32, #tpu.memory_space<vmem>>, %arg3: memref<1x4x4x128xf32, #tpu.memory_space<vmem>>, %arg4: memref<1x3x4xf32, #tpu.memory_space<vmem>>, %arg5: memref<3x4x128xf32, #tpu.memory_space<vmem>>) attributes {dimension_semantics = [#tpu.dimension_semantics<parallel>, #tpu.dimension_semantics<arbitrary>], iteration_bounds = array<i64: 2, 1>, scalar_prefetch = 0 : i64, scratch_operands = 1 : i64, tpu.core_type = #tpu.core_type<tc>, window_params = [{transform_indices = @transform_0, window_bounds = array<i64: 1, 4, 4, 128>}, {transform_indices = @transform_1, window_bounds = array<i64: 1, 4, 4, 128>}, {transform_indices = @transform_2, window_bounds = array<i64: 1, 3, 4>}]} {
    %c0_i32 = arith.constant 0 : i32
    %0 = arith.cmpi eq, %arg1, %c0_i32 : i32
    %1 = arith.extui %0 : i1 to i32
    %c0_i32_0 = arith.constant 0 : i32
    %2 = arith.cmpi ne, %1, %c0_i32_0 : i32
    scf.if %2 {
      %cst_32 = arith.constant 0.000000e+00 : f32
      %43 = vector.broadcast %cst_32 : f32 to vector<3x4x128xf32>
      %c0_33 = arith.constant 0 : index
      %c0_34 = arith.constant 0 : index
      %c0_35 = arith.constant 0 : index
      %44 = vector.load %arg5[%c0_33, %c0_34, %c0_35] : memref<3x4x128xf32, #tpu.memory_space<vmem>>, vector<3x4x128xf32>
      tpu.vector_store %arg5[%c0_33, %c0_34, %c0_35], %43 {strides = array<i32>} : memref<3x4x128xf32, #tpu.memory_space<vmem>>, vector<3x4x128xf32>,
    } else {
    }
    %c0 = arith.constant 0 : index
    %c0_1 = arith.constant 0 : index
    %c0_2 = arith.constant 0 : index
    %c0_3 = arith.constant 0 : index
    %3 = vector.load %arg2[%c0, %c0_1, %c0_2, %c0_3] : memref<1x4x4x128xf32, #tpu.memory_space<vmem>>, vector<1x4x4x128xf32>
    %4 = vector.shape_cast %3 : vector<1x4x4x128xf32> to vector<4x4x128xf32>
    %c0_4 = arith.constant 0 : index
    %c0_5 = arith.constant 0 : index
    %c0_6 = arith.constant 0 : index
    %c0_7 = arith.constant 0 : index
    %5 = vector.load %arg3[%c0_4, %c0_5, %c0_6, %c0_7] : memref<1x4x4x128xf32, #tpu.memory_space<vmem>>, vector<1x4x4x128xf32>
    %6 = vector.shape_cast %5 : vector<1x4x4x128xf32> to vector<4x4x128xf32>
    %cst = arith.constant 1.000000e-03 : f32
    %cst_8 = arith.constant 9.990000e-01 : f32
    %7 = vector.broadcast %cst : f32 to vector<4x4x128xf32>
    %8 = arith.maximumf %7, %4 : vector<4x4x128xf32>
    %9 = vector.broadcast %cst_8 : f32 to vector<4x4x128xf32>
    %10 = arith.minimumf %9, %8 : vector<4x4x128xf32>
    %11 = math.log %10 : vector<4x4x128xf32>
    %12 = arith.mulf %6, %11 : vector<4x4x128xf32>
    %cst_9 = arith.constant 1.000000e+00 : f32
    %13 = vector.broadcast %cst_9 : f32 to vector<4x4x128xf32>
    %14 = arith.subf %13, %6 : vector<4x4x128xf32>
    %cst_10 = arith.constant 1.000000e+00 : f32
    %15 = vector.broadcast %cst_10 : f32 to vector<4x4x128xf32>
    %16 = arith.subf %15, %10 : vector<4x4x128xf32>
    %17 = math.log %16 : vector<4x4x128xf32>
    %18 = arith.mulf %14, %17 : vector<4x4x128xf32>
    %c0_11 = arith.constant 0 : index
    %c0_12 = arith.constant 0 : index
    %c0_13 = arith.constant 0 : index
    %19 = vector.load %arg5[%c0_11, %c0_12, %c0_13] : memref<3x4x128xf32, #tpu.memory_space<vmem>>, vector<1x4x128xf32>
    %20 = vector.shape_cast %19 : vector<1x4x128xf32> to vector<4x128xf32>
    %cst_14 = arith.constant dense<0.000000e+00> : vector<4x128xf32>
    %21 = vector.multi_reduction <add>, %12, %cst_14 [1] : vector<4x4x128xf32> to vector<4x128xf32>
    %22 = arith.addf %20, %21 : vector<4x128xf32>
    %c0_15 = arith.constant 0 : index
    %c0_16 = arith.constant 0 : index
    %c0_17 = arith.constant 0 : index
    %23 = vector.load %arg5[%c0_15, %c0_16, %c0_17] : memref<3x4x128xf32, #tpu.memory_space<vmem>>, vector<1x4x128xf32>
    %24 = vector.shape_cast %23 : vector<1x4x128xf32> to vector<4x128xf32>
    %25 = vector.shape_cast %22 : vector<4x128xf32> to vector<1x4x128xf32>
    tpu.vector_store %arg5[%c0_15, %c0_16, %c0_17], %25 {strides = array<i32>} : memref<3x4x128xf32, #tpu.memory_space<vmem>>, vector<1x4x128xf32>,
    %c1 = arith.constant 1 : index
    %c0_18 = arith.constant 0 : index
    %c0_19 = arith.constant 0 : index
    %26 = vector.load %arg5[%c1, %c0_18, %c0_19] : memref<3x4x128xf32, #tpu.memory_space<vmem>>, vector<1x4x128xf32>
    %27 = vector.shape_cast %26 : vector<1x4x128xf32> to vector<4x128xf32>
    %cst_20 = arith.constant dense<0.000000e+00> : vector<4x128xf32>
    %28 = vector.multi_reduction <add>, %18, %cst_20 [1] : vector<4x4x128xf32> to vector<4x128xf32>
    %29 = arith.addf %27, %28 : vector<4x128xf32>
    %c1_21 = arith.constant 1 : index
    %c0_22 = arith.constant 0 : index
    %c0_23 = arith.constant 0 : index
    %30 = vector.load %arg5[%c1_21, %c0_22, %c0_23] : memref<3x4x128xf32, #tpu.memory_space<vmem>>, vector<1x4x128xf32>
    %31 = vector.shape_cast %30 : vector<1x4x128xf32> to vector<4x128xf32>
    %32 = vector.shape_cast %29 : vector<4x128xf32> to vector<1x4x128xf32>
    tpu.vector_store %arg5[%c1_21, %c0_22, %c0_23], %32 {strides = array<i32>} : memref<3x4x128xf32, #tpu.memory_space<vmem>>, vector<1x4x128xf32>,
    %c2 = arith.constant 2 : index
    %c0_24 = arith.constant 0 : index
    %c0_25 = arith.constant 0 : index
    %33 = vector.load %arg5[%c2, %c0_24, %c0_25] : memref<3x4x128xf32, #tpu.memory_space<vmem>>, vector<1x4x128xf32>
    %34 = vector.shape_cast %33 : vector<1x4x128xf32> to vector<4x128xf32>
    %cst_26 = arith.constant dense<0.000000e+00> : vector<4x128xf32>
    %35 = vector.multi_reduction <add>, %6, %cst_26 [1] : vector<4x4x128xf32> to vector<4x128xf32>
    %36 = arith.addf %34, %35 : vector<4x128xf32>
    %c2_27 = arith.constant 2 : index
    %c0_28 = arith.constant 0 : index
    %c0_29 = arith.constant 0 : index
    %37 = vector.load %arg5[%c2_27, %c0_28, %c0_29] : memref<3x4x128xf32, #tpu.memory_space<vmem>>, vector<1x4x128xf32>
    %38 = vector.shape_cast %37 : vector<1x4x128xf32> to vector<4x128xf32>
    %39 = vector.shape_cast %36 : vector<4x128xf32> to vector<1x4x128xf32>
    tpu.vector_store %arg5[%c2_27, %c0_28, %c0_29], %39 {strides = array<i32>} : memref<3x4x128xf32, #tpu.memory_space<vmem>>, vector<1x4x128xf32>,
    %c0_i32_30 = arith.constant 0 : i32
    %40 = arith.cmpi eq, %arg1, %c0_i32_30 : i32
    %41 = arith.extui %40 : i1 to i32
    %c0_i32_31 = arith.constant 0 : i32
    %42 = arith.cmpi ne, %41, %c0_i32_31 : i32
    scf.if %42 {
      %c0_32 = arith.constant 0 : index
      %c0_33 = arith.constant 0 : index
      %c0_34 = arith.constant 0 : index
      %43 = vector.load %arg5[%c0_32, %c0_33, %c0_34] : memref<3x4x128xf32, #tpu.memory_space<vmem>>, vector<3x4x128xf32>
      %cst_35 = arith.constant dense<0.000000e+00> : vector<3x4xf32>
      %44 = vector.multi_reduction <add>, %43, %cst_35 [2] : vector<3x4x128xf32> to vector<3x4xf32>
      %45 = vector.shape_cast %44 : vector<3x4xf32> to vector<1x3x4xf32>
      %c0_36 = arith.constant 0 : index
      %c0_37 = arith.constant 0 : index
      %c0_38 = arith.constant 0 : index
      %46 = vector.load %arg4[%c0_36, %c0_37, %c0_38] : memref<1x3x4xf32, #tpu.memory_space<vmem>>, vector<1x3x4xf32>
      tpu.vector_store %arg4[%c0_36, %c0_37, %c0_38], %45 {strides = array<i32>} : memref<1x3x4xf32, #tpu.memory_space<vmem>>, vector<1x3x4xf32>,
    } else {
    }
    return
  }
  func.func @transform_0(%arg0: i32, %arg1: i32) -> (i32, i32, i32, i32) {
    %c0_i32 = arith.constant 0 : i32
    %c0_i32_0 = arith.constant 0 : i32
    %c0_i32_1 = arith.constant 0 : i32
    return %arg0, %c0_i32, %arg1, %c0_i32_0 : i32, i32, i32, i32
  }
  func.func @transform_1(%arg0: i32, %arg1: i32) -> (i32, i32, i32, i32) {
    %c0_i32 = arith.constant 0 : i32
    %c0_i32_0 = arith.constant 0 : i32
    %c0_i32_1 = arith.constant 0 : i32
    return %arg0, %c0_i32, %arg1, %c0_i32_0 : i32, i32, i32, i32
  }
  func.func @transform_2(%arg0: i32, %arg1: i32) -> (i32, i32, i32) {
    %c0_i32 = arith.constant 0 : i32
    %c0_i32_0 = arith.constant 0 : i32
    %c0_i32_1 = arith.constant 0 : i32
    return %arg0, %c0_i32, %c0_i32_0 : i32, i32, i32
  }
}

</mosaic_0001>

<llo_original>
// kernel: tpu_custom_call.1
$region0: #{tpu_custom_call.1}
  #allocation0 [shape = 'u32[]', space=smem, size = 0x4, offset = 0x4, fixed_abs, tag = 'smem constant byte address 0x4 - core index']
  #allocation1 [shape = 'u32[144,128]{1,0:T(1,128)}', space=vmem, size = 0x12000, scoped, tag = 'internal scratch']
  #allocation2 [shape = 'f32[3,4,128]{2,1,0:T(4,128)}', space=vmem, size = 0x1800, scoped, tag = 'scratch operand']
  %s0 = inlined_call_operand.hbm [shape: f32[2,4,4,128], index: 0, kind: input, shape index: {}]
  %s1 = inlined_call_operand.hbm [shape: f32[2,4,4,128], index: 1, kind: input, shape index: {}]
  %s2 = inlined_call_operand.vmem [shape: f32[2,3,4], index: 2, kind: output, shape index: {}]
  %s3 = sld [smem:[#allocation0]]
  $region57: #{tpu_custom_call.1} parent=0
    _
  %s5 = ssub.s32 1, %s3
  %s6 = scalar_select 0, %s5, %s3
  $region1: #{tpu_custom_call.1} parent=0
    #allocation3 [shape = 'u8[16384]{0}', space=vmem, size = 0x4000, scoped, tag = 'input window, operand 0']
    #allocation4 [shape = 's32[2]{0}', space=sflag, size = 0x8, scoped, tag = 'scoped memory for tpu_custom_call.1']
    #allocation5 [shape = 'u8[16384]{0}', space=vmem, size = 0x4000, scoped, tag = 'input window, operand 1']
    #allocation6 [shape = 's32[2]{0}', space=sflag, size = 0x8, scoped, tag = 'scoped memory for tpu_custom_call.1']
    %7 = vsyncpa [#allocation4], 0
    %s8 = scalar_lea.sflag [#allocation4], 1
    %9 = vsyncpa %s8, 0
    %10 = vsyncpa [#allocation6], 0
    %s11 = scalar_lea.sflag [#allocation6], 1
    %12 = vsyncpa %s11, 0
    loop: start=0, step=1, limit=4
    $region2: #{tpu_custom_call.1} parent=1 // loop_pre_header
      _
    $region3: #{tpu_custom_call.1} parent=1 // loop_header
      %s14 = sphi 0, %s18
      %p15 = scmp.ge.s32.totalorder %s14, 4
      %s21 = sphi 0, %s33
      %s22 = sphi 0, %s29
      %s23 = sphi 0, %s21
      %s24 = sphi 0, %s22
      %s25 = sphi 0, %s23
      %s26 = sphi 0, %s24
      %s38 = sphi 0, %s40
      %s41 = sphi 0, %s38
      %s42 = sphi 0, %s41
      %s58 = sphi 0, %s42
      %s66 = sphi 0, %s68
      %s69 = sphi 0, %s66
      %s70 = sphi 0, %s69
      %s86 = sphi 0, %s70
      %s92 = sphi 0, %s94
      %s95 = sphi 0, %s92
      %s96 = sphi 0, %s95
      %s112 = sphi 0, %s96
    $region4: #{tpu_custom_call.1} parent=1 // loop_header_branch
      %17 = sbr.rel (%p15) target = $region8
    $region5: #{tpu_custom_call.1} parent=1 // loop_body
      %s19 = ssub.s32 %s14, 1
      %s20 = ssub.s32 %s14, 2
      %s27 = sadd.s32 1, %s22
      %p28 = scmp.ge.s32.totalorder %s27, 1
      %s29 = scalar_select %p28, 0, %s27
      %s30 = sadd.s32 1, %s21
      %s31 = scalar_select %p28, %s30, %s21
      %p32 = scmp.ge.s32.totalorder %s31, 2
      %s33 = scalar_select %p32, 0, %s31
      %s34 = ssub.s32 %s21, %s33
      %s35 = ssub.s32 %s22, %s29
      %s36 = sor.u32 %s34, %s35
      %p37 = scmp.eq.s32.totalorder %s36, 0
      %s39 = sadd.s32 %s38, 1
      %s40 = scalar_select %p37, %s38, %s39
      %p43 = pneg %p37
      %p44 = scmp.eq.s32.totalorder %s14, 1
      %p45 = por %p43, %p44
      %p46 = scmp.ne.s32.totalorder %s38, %s41
      %p47 = scmp.eq.s32.totalorder %s14, 0
      %p48 = por %p46, %p47
      %p49 = scmp.ne.s32.totalorder %s38, %s41
      %p50 = scmp.eq.s32.totalorder %s19, 1
      %p51 = por %p49, %p50
      %p52 = scmp.ne.s32.totalorder %s41, %s42
      %p53 = scmp.eq.s32.totalorder %s19, 0
      %p54 = por %p52, %p53
      %p55 = scmp.ne.s32.totalorder %s41, %s42
      %p56 = scmp.eq.s32.totalorder %s20, 1
      %p57 = por %p55, %p56
      %p59 = scmp.ne.s32.totalorder %s42, %s58
      %p60 = scmp.eq.s32.totalorder %s20, 0
      %p61 = por %p59, %p60
      %s62 = ssub.s32 %s21, %s33
      %s63 = ssub.s32 %s22, %s29
      %s64 = sor.u32 %s62, %s63
      %p65 = scmp.eq.s32.totalorder %s64, 0
      %s67 = sadd.s32 %s66, 1
      %s68 = scalar_select %p65, %s66, %s67
      %p71 = pneg %p65
      %p72 = scmp.eq.s32.totalorder %s14, 1
      %p73 = por %p71, %p72
      %p74 = scmp.ne.s32.totalorder %s66, %s69
      %p75 = scmp.eq.s32.totalorder %s14, 0
      %p76 = por %p74, %p75
      %p77 = scmp.ne.s32.totalorder %s66, %s69
      %p78 = scmp.eq.s32.totalorder %s19, 1
      %p79 = por %p77, %p78
      %p80 = scmp.ne.s32.totalorder %s69, %s70
      %p81 = scmp.eq.s32.totalorder %s19, 0
      %p82 = por %p80, %p81
      %p83 = scmp.ne.s32.totalorder %s69, %s70
      %p84 = scmp.eq.s32.totalorder %s20, 1
      %p85 = por %p83, %p84
      %p87 = scmp.ne.s32.totalorder %s70, %s86
      %p88 = scmp.eq.s32.totalorder %s20, 0
      %p89 = por %p87, %p88
      %s90 = ssub.s32 %s21, %s33
      %p91 = scmp.eq.s32.totalorder %s90, 0
      %s93 = sadd.s32 %s92, 1
      %s94 = scalar_select %p91, %s92, %s93
      %p97 = pneg %p91
      %p98 = scmp.eq.s32.totalorder %s14, 1
      %p99 = por %p97, %p98
      %p100 = scmp.ne.s32.totalorder %s92, %s95
      %p101 = scmp.eq.s32.totalorder %s14, 0
      %p102 = por %p100, %p101
      %p103 = scmp.ne.s32.totalorder %s92, %s95
      %p104 = scmp.eq.s32.totalorder %s19, 1
      %p105 = por %p103, %p104
      %p106 = scmp.ne.s32.totalorder %s95, %s96
      %p107 = scmp.eq.s32.totalorder %s19, 0
      %p108 = por %p106, %p107
      %p109 = scmp.ne.s32.totalorder %s95, %s96
      %p110 = scmp.eq.s32.totalorder %s20, 1
      %p111 = por %p109, %p110
      %p113 = scmp.ne.s32.totalorder %s96, %s112
      %p114 = scmp.eq.s32.totalorder %s20, 0
      %p115 = por %p113, %p114
      %p116 = scmp.le.s32.totalorder 1, %s14
      %p117 = scmp.lt.s32.totalorder %s14, 3
      %p118 = pnand %p116, %p117
      %p119 = pneg %p118
      // Predicated region
      $region9: #{tpu_custom_call.1} parent=5 // pred_check
        _
      $region10: #{tpu_custom_call.1} parent=5 // pred_check_branch
        %121 = sbr.rel (%p118) target = $region12
      $region11: #{tpu_custom_call.1} parent=5 // pred_region
        %s122 = ssub.s32 %s14, 1
      $region12: #{tpu_custom_call.1} parent=5 // pred_fallthru
        _
      %p123 = scmp.lt.s32.totalorder %s14, 2
      // Predicated region
      $region13: #{tpu_custom_call.1} parent=5 // pred_check
        %p124 = pneg %p123
      $region14: #{tpu_custom_call.1} parent=5 // pred_check_branch
        %126 = sbr.rel (%p124) target = $region16
      $region15: #{tpu_custom_call.1} parent=5 // pred_region
        // Predicated region
        $region17: #{tpu_custom_call.1} parent=15 // pred_check
          %p127 = pneg %p48
        $region18: #{tpu_custom_call.1} parent=15 // pred_check_branch
          %129 = sbr.rel (%p127) target = $region20
        $region19: #{tpu_custom_call.1} parent=15 // pred_region
          %s130 = sand.u32 %s38, 1
          %s131 = scalar_lea.sflag [#allocation4], %s130
          %s132 = sand.u32 %s38, 1
          %s133 = smul.addr %s132, 16
          %s134 = scalar_lea.vmem [#allocation3], %s133
          %s136 = ssub.s32 256, 256
          %137 = vsyncadd %s131, %s136
          %s138 = smul.addr %s21, 4
          %s139 = sadd.s32 %s22, %s138
          %s140 = smul.addr %s139, 64
          %s141 = scalar_lea.hbm %s0, %s140
          %s142 = sshll.u32 %s134, 4
          %s143 = int_to_ptr.vmem [resolvable:$true] %s142
          %148 = dma.hbm_to_vmem [thread:$0]  %s141, 256, %s143, %s131, 64, 64, 4
        $region20: #{tpu_custom_call.1} parent=15 // pred_fallthru
          _
        // Predicated region
        $region21: #{tpu_custom_call.1} parent=15 // pred_check
          %p149 = pneg %p76
        $region22: #{tpu_custom_call.1} parent=15 // pred_check_branch
          %151 = sbr.rel (%p149) target = $region24
        $region23: #{tpu_custom_call.1} parent=15 // pred_region
          %s152 = sand.u32 %s66, 1
          %s153 = scalar_lea.sflag [#allocation6], %s152
          %s154 = sand.u32 %s66, 1
          %s155 = smul.addr %s154, 16
          %s156 = scalar_lea.vmem [#allocation5], %s155
          %s158 = ssub.s32 256, 256
          %159 = vsyncadd %s153, %s158
          %s160 = smul.addr %s21, 4
          %s161 = sadd.s32 %s22, %s160
          %s162 = smul.addr %s161, 64
          %s163 = scalar_lea.hbm %s1, %s162
          %s164 = sshll.u32 %s156, 4
          %s165 = int_to_ptr.vmem [resolvable:$true] %s164
          %170 = dma.hbm_to_vmem [thread:$0]  %s163, 256, %s165, %s153, 64, 64, 4
        $region24: #{tpu_custom_call.1} parent=15 // pred_fallthru
          _
      $region16: #{tpu_custom_call.1} parent=5 // pred_fallthru
        _
      %p171 = scmp.le.s32.totalorder 1, %s14
      %p172 = scmp.lt.s32.totalorder %s14, 3
      %p173 = pnand %p171, %p172
      %p174 = pneg %p173
      // Predicated region
      $region25: #{tpu_custom_call.1} parent=5 // pred_check
        _
      $region26: #{tpu_custom_call.1} parent=5 // pred_check_branch
        %176 = sbr.rel (%p173) target = $region28
      $region27: #{tpu_custom_call.1} parent=5 // pred_region
        %s177 = ssub.s32 %s14, 1
        %s178 = sand.u32 %s41, 1
        %s179 = scalar_lea.sflag [#allocation4], %s178
        %s180 = sand.u32 %s41, 1
        %s181 = smul.addr %s180, 16
        %s182 = scalar_lea.vmem [#allocation3], %s181
        // Predicated region
        $region29: #{tpu_custom_call.1} parent=27 // pred_check
          %p183 = pneg %p54
        $region30: #{tpu_custom_call.1} parent=27 // pred_check_branch
          %185 = sbr.rel (%p183) target = $region32
        $region31: #{tpu_custom_call.1} parent=27 // pred_region
          %186 = dma.done %s179, 256
        $region32: #{tpu_custom_call.1} parent=27 // pred_fallthru
          _
        %s187 = sand.u32 %s69, 1
        %s188 = scalar_lea.sflag [#allocation6], %s187
        %s189 = sand.u32 %s69, 1
        %s190 = smul.addr %s189, 16
        %s191 = scalar_lea.vmem [#allocation5], %s190
        // Predicated region
        $region33: #{tpu_custom_call.1} parent=27 // pred_check
          %p192 = pneg %p82
        $region34: #{tpu_custom_call.1} parent=27 // pred_check_branch
          %194 = sbr.rel (%p192) target = $region36
        $region35: #{tpu_custom_call.1} parent=27 // pred_region
          %195 = dma.done %s188, 256
        $region36: #{tpu_custom_call.1} parent=27 // pred_fallthru
          _
        %s196 = sand.u32 %s41, 1
        %s197 = scalar_lea.sflag [#allocation4], %s196
        %s198 = sand.u32 %s41, 1
        %s199 = smul.addr %s198, 16
        %s200 = scalar_lea.vmem [#allocation3], %s199
        %p201 = pneg %p54
        %p202 = pneg %p51
        %s203 = sand.u32 %s69, 1
        %s204 = scalar_lea.sflag [#allocation6], %s203
        %s205 = sand.u32 %s69, 1
        %s206 = smul.addr %s205, 16
        %s207 = scalar_lea.vmem [#allocation5], %s206
        %p208 = pneg %p82
        %p209 = pneg %p79
        %p210 = pneg %p108
        %p211 = pneg %p105
        %p212 = scmp.lt.s32.totalorder %s23, 1
        %s213 = scalar_select %p212, %s23, 1
        %s214 = smul.addr %s213, 4
        %s215 = scalar_lea.vmem %s2, %s214
        %p216 = scmp.lt.s32.totalorder %s23, 1
        %s217 = scalar_select %p216, %s23, 1
        %s218 = smul.addr %s217, 4
        %s219 = scalar_lea.vmem %s2, %s218
        %p220 = scmp.eq.s32.totalorder %s24, 0
        // Predicated region
        $region37: #{tpu_custom_call.1} parent=27 // pred_check
          %p221 = pneg %p220
        $region38: #{tpu_custom_call.1} parent=27 // pred_check_branch
          %223 = sbr.rel (%p221) target = $region40
        $region39: #{tpu_custom_call.1} parent=27 // pred_region
          %224 = vst [vmem:[#allocation2] sm:$0xf] 0.0
          %225 = vst [vmem:[#allocation2 + $0x4] sm:$0xf] 0.0
          %226 = vst [vmem:[#allocation2 + $0x8] sm:$0xf] 0.0
        $region40: #{tpu_custom_call.1} parent=27 // pred_fallthru
          _
        %v227 = vld [vmem:[%s182] sm:$0xf]
        %v228 = vld [vmem:[%s182 + $0x4] sm:$0xf]
        %v229 = vld [vmem:[%s182 + $0x8] sm:$0xf]
        %v230 = vld [vmem:[%s182 + $0xc] sm:$0xf]
        %v231 = vld [vmem:[%s191] sm:$0xf]
        %v232 = vld [vmem:[%s191 + $0x4] sm:$0xf]
        %v233 = vld [vmem:[%s191 + $0x8] sm:$0xf]
        %v234 = vld [vmem:[%s191 + $0xc] sm:$0xf]
        %v235 = vmax.f32 %v227, 0.001
        %v236 = vmax.f32 %v228, 0.001
        %v237 = vmax.f32 %v229, 0.001
        %v238 = vmax.f32 %v230, 0.001
        %v239 = vmin.f32 %v235, 0.999
        %v240 = vmin.f32 %v236, 0.999
        %v241 = vmin.f32 %v237, 0.999
        %v242 = vmin.f32 %v238, 0.999
        %v243 = vlog2.pop %v239
        %v244 = vmul.f32 %v243, 0.6931472
        %v245 = vlog2.pop %v240
        %v246 = vmul.f32 %v245, 0.6931472
        %v247 = vlog2.pop %v241
        %v248 = vmul.f32 %v247, 0.6931472
        %v249 = vlog2.pop %v242
        %v250 = vmul.f32 %v249, 0.6931472
        %v251 = vmul.f32 %v231, %v244
        %v252 = vmul.f32 %v232, %v246
        %v253 = vmul.f32 %v233, %v248
        %v254 = vmul.f32 %v234, %v250
        %v255 = vsub.f32 1.0, %v231
        %v256 = vsub.f32 1.0, %v232
        %v257 = vsub.f32 1.0, %v233
        %v258 = vsub.f32 1.0, %v234
        %v259 = vsub.f32 1.0, %v239
        %v260 = vsub.f32 1.0, %v240
        %v261 = vsub.f32 1.0, %v241
        %v262 = vsub.f32 1.0, %v242
        %v263 = vlog2.pop %v259
        %v264 = vmul.f32 %v263, 0.6931472
        %v265 = vlog2.pop %v260
        %v266 = vmul.f32 %v265, 0.6931472
        %v267 = vlog2.pop %v261
        %v268 = vmul.f32 %v267, 0.6931472
        %v269 = vlog2.pop %v262
        %v270 = vmul.f32 %v269, 0.6931472
        %v271 = vmul.f32 %v255, %v264
        %v272 = vmul.f32 %v256, %v266
        %v273 = vmul.f32 %v257, %v268
        %v274 = vmul.f32 %v258, %v270
        %v275 = vld [vmem:[#allocation2] sm:$0xf]
        %vm276 = vcmask 1043456
        %v277 = vsel %vm276, %v251, 0.0
        %v278 = vrot.slane %v277, 4
        %v279 = vadd.f32 %v277, %v278
        %v280 = vrot.slane %v279, 2
        %v281 = vadd.f32 %v279, %v280
        %v282 = vrot.slane %v281, 1
        %v283 = vadd.f32 %v281, %v282
        %v284 = vsel %vm276, %v252, 0.0
        %v285 = vrot.slane %v284, 4
        %v286 = vadd.f32 %v284, %v285
        %v287 = vrot.slane %v286, 2
        %v288 = vadd.f32 %v286, %v287
        %v289 = vrot.slane %v288, 1
        %v290 = vadd.f32 %v288, %v289
        %v291 = vsel %vm276, %v253, 0.0
        %v292 = vrot.slane %v291, 4
        %v293 = vadd.f32 %v291, %v292
        %v294 = vrot.slane %v293, 2
        %v295 = vadd.f32 %v293, %v294
        %v296 = vrot.slane %v295, 1
        %v297 = vadd.f32 %v295, %v296
        %v298 = vsel %vm276, %v254, 0.0
        %v299 = vrot.slane %v298, 4
        %v300 = vadd.f32 %v298, %v299
        %v301 = vrot.slane %v300, 2
        %v302 = vadd.f32 %v300, %v301
        %v303 = vrot.slane %v302, 1
        %v304 = vadd.f32 %v302, %v303
        %vm309 = vcmask 1041409
        %v310 = vsel %vm309, %v290, %v283
        %vm311 = vcmask 1042434
        %v312 = vsel %vm311, %v297, %v310
        %vm313 = vcmask 1043459
        %v314 = vsel %vm313, %v304, %v312
        %v316 = vadd.f32 %v275, %v314
        %317 = vst [vmem:[#allocation2] sm:$0xf] %v316
        %s318 = scalar_lea.vmem [#allocation2], 4
        %v319 = vld [vmem:[%s318] sm:$0xf]
        %v320 = vsel %vm276, %v271, 0.0
        %v321 = vrot.slane %v320, 4
        %v322 = vadd.f32 %v320, %v321
        %v323 = vrot.slane %v322, 2
        %v324 = vadd.f32 %v322, %v323
        %v325 = vrot.slane %v324, 1
        %v326 = vadd.f32 %v324, %v325
        %v327 = vsel %vm276, %v272, 0.0
        %v328 = vrot.slane %v327, 4
        %v329 = vadd.f32 %v327, %v328
        %v330 = vrot.slane %v329, 2
        %v331 = vadd.f32 %v329, %v330
        %v332 = vrot.slane %v331, 1
        %v333 = vadd.f32 %v331, %v332
        %v334 = vsel %vm276, %v273, 0.0
        %v335 = vrot.slane %v334, 4
        %v336 = vadd.f32 %v334, %v335
        %v337 = vrot.slane %v336, 2
        %v338 = vadd.f32 %v336, %v337
        %v339 = vrot.slane %v338, 1
        %v340 = vadd.f32 %v338, %v339
        %v341 = vsel %vm276, %v274, 0.0
        %v342 = vrot.slane %v341, 4
        %v343 = vadd.f32 %v341, %v342
        %v344 = vrot.slane %v343, 2
        %v345 = vadd.f32 %v343, %v344
        %v346 = vrot.slane %v345, 1
        %v347 = vadd.f32 %v345, %v346
        %v352 = vsel %vm309, %v333, %v326
        %v353 = vsel %vm311, %v340, %v352
        %v354 = vsel %vm313, %v347, %v353
        %v356 = vadd.f32 %v319, %v354
        %357 = vst [vmem:[%s318] sm:$0xf] %v356
        %s358 = scalar_lea.vmem [#allocation2], 8
        %v359 = vld [vmem:[%s358] sm:$0xf]
        %v360 = vsel %vm276, %v231, 0.0
        %v361 = vrot.slane %v360, 4
        %v362 = vadd.f32 %v360, %v361
        %v363 = vrot.slane %v362, 2
        %v364 = vadd.f32 %v362, %v363
        %v365 = vrot.slane %v364, 1
        %v366 = vadd.f32 %v364, %v365
        %v367 = vsel %vm276, %v232, 0.0
        %v368 = vrot.slane %v367, 4
        %v369 = vadd.f32 %v367, %v368
        %v370 = vrot.slane %v369, 2
        %v371 = vadd.f32 %v369, %v370
        %v372 = vrot.slane %v371, 1
        %v373 = vadd.f32 %v371, %v372
        %v374 = vsel %vm276, %v233, 0.0
        %v375 = vrot.slane %v374, 4
        %v376 = vadd.f32 %v374, %v375
        %v377 = vrot.slane %v376, 2
        %v378 = vadd.f32 %v376, %v377
        %v379 = vrot.slane %v378, 1
        %v380 = vadd.f32 %v378, %v379
        %v381 = vsel %vm276, %v234, 0.0
        %v382 = vrot.slane %v381, 4
        %v383 = vadd.f32 %v381, %v382
        %v384 = vrot.slane %v383, 2
        %v385 = vadd.f32 %v383, %v384
        %v386 = vrot.slane %v385, 1
        %v387 = vadd.f32 %v385, %v386
        %v392 = vsel %vm309, %v373, %v366
        %v393 = vsel %vm311, %v380, %v392
        %v394 = vsel %vm313, %v387, %v393
        %v396 = vadd.f32 %v359, %v394
        %397 = vst [vmem:[%s358] sm:$0xf] %v396
        // Predicated region
        $region41: #{tpu_custom_call.1} parent=27 // pred_check
          %p398 = pneg %p220
        $region42: #{tpu_custom_call.1} parent=27 // pred_check_branch
          %400 = sbr.rel (%p398) target = $region44
        $region43: #{tpu_custom_call.1} parent=27 // pred_region
          %v401 = vld [vmem:[#allocation2] sm:$0xf]
          %v402 = vld [vmem:[#allocation2 + $0x4] sm:$0xf]
          %v403 = vld [vmem:[#allocation2 + $0x8] sm:$0xf]
          %v404 = vsel %vm276, %v401, 0.0
          %405 = vadd.xlane.f32.xlu0 %v404
          %v406 = vpop.xlane.xlu0 %405
          %v407 = vsel %vm276, %v402, 0.0
          %408 = vadd.xlane.f32.xlu0 %v407
          %v409 = vpop.xlane.xlu0 %408
          %v410 = vsel %vm276, %v403, 0.0
          %411 = vadd.xlane.f32.xlu0 %v410
          %v412 = vpop.xlane.xlu0 %411
          %v416 = vlaneseq
          %v417 = vand.u32 %v416, 127
          %v418 = vlaneseq
          %v419 = vshrl.u32 %v418, 7
          %v420 = vsub.s32 %v417, %v419
          %v421 = vrot.slane %v406, %v420
          %v422 = vlaneseq
          %v423 = vshrl.u32 %v422, 7
          %v424 = vsub.s32 %v417, %v423
          %v425 = vrot.slane %v409, %v424
          %v426 = vlaneseq
          %v427 = vshrl.u32 %v426, 7
          %v428 = vsub.s32 %v417, %v427
          %v429 = vrot.slane %v412, %v428
          %v430 = vsel %vm309, %v425, %v421
          %v431 = vsel %vm311, %v429, %v430
          %vm433 = vcmask 26624
          %434 = vst.msk [vmem:[%s219] sm:$0x7] %vm433, %v431
        $region44: #{tpu_custom_call.1} parent=27 // pred_fallthru
          _
        %p435 = scmp.lt.s32.totalorder %s23, 1
        %s436 = scalar_select %p435, %s23, 1
        %s437 = smul.addr %s436, 4
        %s438 = scalar_lea.vmem %s2, %s437
        // Predicated region
        $region45: #{tpu_custom_call.1} parent=27 // pred_check
          %p439 = pneg %p105
        $region46: #{tpu_custom_call.1} parent=27 // pred_check_branch
          %441 = sbr.rel (%p439) target = $region48
        $region47: #{tpu_custom_call.1} parent=27 // pred_region
          _
        $region48: #{tpu_custom_call.1} parent=27 // pred_fallthru
          _
      $region28: #{tpu_custom_call.1} parent=5 // pred_fallthru
        _
      %p442 = scmp.le.s32.totalorder 2, %s14
      // Predicated region
      $region49: #{tpu_custom_call.1} parent=5 // pred_check
        %p443 = pneg %p442
      $region50: #{tpu_custom_call.1} parent=5 // pred_check_branch
        %445 = sbr.rel (%p443) target = $region52
      $region51: #{tpu_custom_call.1} parent=5 // pred_region
        %s446 = ssub.s32 %s14, 2
        // Predicated region
        $region53: #{tpu_custom_call.1} parent=51 // pred_check
          %p447 = pneg %p111
        $region54: #{tpu_custom_call.1} parent=51 // pred_check_branch
          %449 = sbr.rel (%p447) target = $region56
        $region55: #{tpu_custom_call.1} parent=51 // pred_region
          %p450 = scmp.lt.s32.totalorder %s25, 1
          %s451 = scalar_select %p450, %s25, 1
          %s452 = smul.addr %s451, 4
          %s453 = scalar_lea.vmem %s2, %s452
        $region56: #{tpu_custom_call.1} parent=51 // pred_fallthru
          _
      $region52: #{tpu_custom_call.1} parent=5 // pred_fallthru
        _
    $region6: #{tpu_custom_call.1} parent=1 // loop_footer
      %s18 = sadd.s32 1, %s14
    $region7: #{tpu_custom_call.1} parent=1 // loop_footer_branch
      %13 = sbr.rel target = $region3
    $region8: #{tpu_custom_call.1} parent=1 // loop_exit
      _
    %454 = vsyncpa [#allocation4], 1
    %s455 = scalar_lea.sflag [#allocation4], 1
    %456 = vsyncpa %s455, 1
    %457 = vsyncpa [#allocation6], 1
    %s458 = scalar_lea.sflag [#allocation6], 1
    %459 = vsyncpa %s458, 1

</llo_original>
